<compile_context>
chip_gen: v5e
topology: v5e:2x2
jax: 0.10.0
libtpu: 0.0.40
codegen_flags: <defaults>
</compile_context>

<pallas_src>
import jax
import jax.numpy as jnp
from jax.experimental import pallas as pl
from jax.experimental.pallas import tpu as pltpu

_NEG_BIG = -1e30  # bias for padded output lanes -> they vanish from max/sum-exp


def _round_up(v, m):
    return ((v + m - 1) // m) * m


def homo_kernel(xcat_ref, wsage_ref, bl_ref, w1_ref, b1_ref,
                w2_ref, b2_ref, w3_ref, b3_ref, out_ref):
    """One row tile of fused SAGEConv + MLP + log_softmax.

    xcat: (tm, 2F) = [mean-aggregated neighbor feats | self feats]
    out : (tm, 128) lane-dense log-softmax; only lanes 0-1 are real classes.
    """
    # Fused SAGEConv: [agg | x] @ [wl; wr] + bl   (lin_l has bias, lin_r none)
    xb = xcat_ref[...].astype(jnp.bfloat16)
    h = jnp.dot(xb, wsage_ref[...], preferred_element_type=jnp.float32) + bl_ref[...]
    h = jnp.maximum(h, 0.0)

    # MLP 128 -> 64 -> 32 with ReLU (f32 elementwise, bf16 matmul operands)
    h = jnp.dot(h.astype(jnp.bfloat16), w1_ref[...],
                preferred_element_type=jnp.float32) + b1_ref[...]
    h = jnp.maximum(h, 0.0)
    h = jnp.dot(h.astype(jnp.bfloat16), w2_ref[...],
                preferred_element_type=jnp.float32) + b2_ref[...]
    h = jnp.maximum(h, 0.0)

    # Final linear padded to 128 lanes; padded lanes get bias -1e30 so the
    # unmasked max / sum-exp below only "see" the 2 real classes.
    logits = jnp.dot(h.astype(jnp.bfloat16), w3_ref[...],
                     preferred_element_type=jnp.float32) + b3_ref[...]

    m = jnp.max(logits, axis=-1, keepdims=True)
    z = logits - m
    lse = jnp.log(jnp.sum(jnp.exp(z), axis=-1, keepdims=True))
    out_ref[...] = z - lse                       # lane-dense (tm, 128) store


def init_params(key, feature_dim):
    ks = jax.random.split(key, 5)

    def lin(k, fan_in, fan_out, bias=True):
        bound = 1.0 / jnp.sqrt(jnp.float32(fan_in))
        kw, kb = jax.random.split(k)
        w = jax.random.uniform(kw, (fan_in, fan_out), jnp.float32, -bound, bound)
        b = (jax.random.uniform(kb, (1, fan_out), jnp.float32, -bound, bound)
             if bias else None)
        return w, b

    wl, bl = lin(ks[0], feature_dim, 128)             # SAGEConv lin_l (bias)
    wr, _ = lin(ks[1], feature_dim, 128, bias=False)  # SAGEConv lin_r (no bias)
    w1, b1 = lin(ks[2], 128, 64)
    w2, b2 = lin(ks[3], 64, 32)
    w3, b3 = lin(ks[4], 32, 2)
    return dict(wl=wl, bl=bl, wr=wr, w1=w1, b1=b1, w2=w2, b2=b2, w3=w3, b3=b3)


def homo_forward(drug_hidden_out, protein_hidden_out, all_edges, params, key):
    # ---------------- graph glue (plain JAX) ----------------
    n_fea = jnp.concatenate([drug_hidden_out, protein_hidden_out], axis=0)
    num_nodes = n_fea.shape[0]
    feat = n_fea.shape[1]

    # keep every other entry of all_edges, transpose to (2, E)
    pos = jnp.asarray([list(all_edges[i]) for i in range(len(all_edges)) if i % 2 == 0],
                      dtype=jnp.int32).T
    E = pos.shape[1]

    # TODO(synk): PyG negative_sampling(force_undirected=True) excludes existing
    # undirected edges; here we draw deterministic random node pairs as a stand-in.
    k1, k2 = jax.random.split(key)
    neg = jnp.stack([jax.random.randint(k1, (E,), 0, num_nodes, dtype=jnp.int32),
                     jax.random.randint(k2, (E,), 0, num_nodes, dtype=jnp.int32)], axis=0)

    edge_index = jnp.concatenate([pos, neg], axis=-1)            # (2, M)
    M = edge_index.shape[1]
    src, dst = edge_index[0], edge_index[1]

    # per-row feature (as in the reference: rows indexed exactly like PyTorch's
    # SAGEConv(x=endpoint_product, edge_index) call)
    x = (n_fea[src] * n_fea[dst]).astype(jnp.float32)            # (M, F)

    # sparse mean aggregation (replaces the dense (M, M) adjacency matmul):
    # agg[i] = mean over edges (src -> dst == i) of x[src]
    agg = jnp.zeros((M, feat), jnp.float32).at[dst].add(x[src])
    deg = jnp.zeros((M, 1), jnp.float32).at[dst].add(1.0)
    agg = agg / jnp.maximum(deg, 1.0)

    # fused SAGEConv operands
    x_cat = jnp.concatenate([agg, x], axis=1)                    # (M, 2F)
    w_sage = jnp.concatenate([params["wl"], params["wr"]], axis=0)  # (2F, 128)

    # lane-dense final layer: pad (32, 2) -> (32, 128); padded lanes bias -1e30
    w3_pad = jnp.zeros((32, 128), jnp.float32).at[:, :2].set(params["w3"])
    b3_pad = jnp.full((1, 128), _NEG_BIG, jnp.float32).at[:, :2].set(params["b3"])

    # row tiling: tm multiple of 8, rows padded with zeros (sliced off later)
    tm = min(256, _round_up(M, 8))
    m_pad = _round_up(M, tm)
    x_cat = jnp.pad(x_cat, ((0, m_pad - M), (0, 0)))

    two_f = 2 * feat
    flops = 2 * m_pad * (two_f * 128 + 128 * 64 + 64 * 32 + 32 * 128)
    bytes_accessed = (m_pad * two_f * 4 + m_pad * 128 * 4
                      + 2 * (two_f * 128 + 128 * 64 + 64 * 32 + 32 * 128)
                      + 4 * (128 + 64 + 32 + 128))

    grid_spec = pltpu.PrefetchScalarGridSpec(
        num_scalar_prefetch=0,
        grid=(m_pad // tm,),
        in_specs=[
            pl.BlockSpec((tm, two_f), lambda i: (i, 0)),       # x_cat row tile
            pl.BlockSpec((two_f, 128), lambda i: (0, 0)),      # fused SAGE weight
            pl.BlockSpec((1, 128), lambda i: (0, 0)),          # bl
            pl.BlockSpec((128, 64), lambda i: (0, 0)),         # w1
            pl.BlockSpec((1, 64), lambda i: (0, 0)),           # b1
            pl.BlockSpec((64, 32), lambda i: (0, 0)),          # w2
            pl.BlockSpec((1, 32), lambda i: (0, 0)),           # b2
            pl.BlockSpec((32, 128), lambda i: (0, 0)),         # w3 (lane-padded)
            pl.BlockSpec((1, 128), lambda i: (0, 0)),          # b3 (lane-padded)
        ],
        out_specs=pl.BlockSpec((tm, 128), lambda i: (i, 0)),
    )

    out = pl.pallas_call(
        homo_kernel,
        out_shape=jax.ShapeDtypeStruct((m_pad, 128), jnp.float32),
        grid_spec=grid_spec,
        compiler_params=pltpu.CompilerParams(
            dimension_semantics=("parallel",)),
        cost_estimate=pl.CostEstimate(
            flops=flops,
            transcendentals=m_pad * 129,
            bytes_accessed=bytes_accessed),
    )(x_cat,
      w_sage.astype(jnp.bfloat16), params["bl"],
      params["w1"].astype(jnp.bfloat16), params["b1"],
      params["w2"].astype(jnp.bfloat16), params["b2"],
      w3_pad.astype(jnp.bfloat16), b3_pad)

    prob = out[:M, :2]                                           # (M, 2)

    # label = cat(ones_like(real_sub_prob), zeros_like(fake_sub_prob))
    label = jnp.concatenate([jnp.ones((E, 2), prob.dtype),
                             jnp.zeros((M - E, 2), prob.dtype)], axis=0)
    return prob, label


if __name__ == "__main__":
    key = jax.random.PRNGKey(0)
    k_drug, k_prot, k_par, k_neg = jax.random.split(key, 4)

    feature_dim = 32
    n_drug, n_prot = 4, 4

    drug_hidden_out = jax.random.normal(k_drug, (n_drug, feature_dim), jnp.float32)
    protein_hidden_out = jax.random.normal(k_prot, (n_prot, feature_dim), jnp.float32)

    # 16 entries; even indices kept -> 8 positive edges (drug i -- protein j)
    all_edges = [(0, 4), (4, 0), (1, 5), (5, 1), (2, 6), (6, 2), (3, 7), (7, 3),
                 (0, 5), (5, 0), (1, 6), (6, 1), (2, 7), (7, 2), (3, 4), (4, 3)]

    params = init_params(k_par, feature_dim)

    prob, label = homo_forward(drug_hidden_out, protein_hidden_out,
                               all_edges, params, k_neg)
    jax.block_until_ready(prob)
    jax.block_until_ready(label)

    assert prob.shape == (16, 2) and label.shape == (16, 2)
    assert bool(jnp.all(jnp.isfinite(prob)))
    print("KERNEL_OK")
</pallas_src>

<mosaic_0001>
module attributes {stable_mosaic.version = 11 : i64} {
  func.func @homo_kernel(%arg0: i32, %arg1: memref<16x64xf32, #tpu.memory_space<vmem>>, %arg2: memref<64x128xbf16, #tpu.memory_space<vmem>>, %arg3: memref<1x128xf32, #tpu.memory_space<vmem>>, %arg4: memref<128x64xbf16, #tpu.memory_space<vmem>>, %arg5: memref<1x64xf32, #tpu.memory_space<vmem>>, %arg6: memref<64x32xbf16, #tpu.memory_space<vmem>>, %arg7: memref<1x32xf32, #tpu.memory_space<vmem>>, %arg8: memref<32x128xbf16, #tpu.memory_space<vmem>>, %arg9: memref<1x128xf32, #tpu.memory_space<vmem>>, %arg10: memref<16x128xf32, #tpu.memory_space<vmem>>) attributes {dimension_semantics = [#tpu.dimension_semantics<parallel>], iteration_bounds = array<i64: 1>, scalar_prefetch = 0 : i64, scratch_operands = 0 : i64, tpu.core_type = #tpu.core_type<tc>, window_params = [{transform_indices = @transform_0, window_bounds = array<i64: 16, 64>}, {pipeline_mode = #tpu.pipeline_mode<synchronous>, transform_indices = @transform_1, window_bounds = array<i64: 64, 128>}, {pipeline_mode = #tpu.pipeline_mode<synchronous>, transform_indices = @transform_2, window_bounds = array<i64: 1, 128>}, {pipeline_mode = #tpu.pipeline_mode<synchronous>, transform_indices = @transform_3, window_bounds = array<i64: 128, 64>}, {pipeline_mode = #tpu.pipeline_mode<synchronous>, transform_indices = @transform_4, window_bounds = array<i64: 1, 64>}, {pipeline_mode = #tpu.pipeline_mode<synchronous>, transform_indices = @transform_5, window_bounds = array<i64: 64, 32>}, {pipeline_mode = #tpu.pipeline_mode<synchronous>, transform_indices = @transform_6, window_bounds = array<i64: 1, 32>}, {pipeline_mode = #tpu.pipeline_mode<synchronous>, transform_indices = @transform_7, window_bounds = array<i64: 32, 128>}, {pipeline_mode = #tpu.pipeline_mode<synchronous>, transform_indices = @transform_8, window_bounds = array<i64: 1, 128>}, {transform_indices = @transform_9, window_bounds = array<i64: 16, 128>}]} {
    %c0 = arith.constant 0 : index
    %c0_0 = arith.constant 0 : index
    %0 = vector.load %arg1[%c0, %c0_0] : memref<16x64xf32, #tpu.memory_space<vmem>>, vector<16x64xf32>
    %1 = arith.truncf %0 : vector<16x64xf32> to vector<16x64xbf16>
    %c0_1 = arith.constant 0 : index
    %c0_2 = arith.constant 0 : index
    %2 = vector.load %arg2[%c0_1, %c0_2] : memref<64x128xbf16, #tpu.memory_space<vmem>>, vector<64x128xbf16>
    %cst = arith.constant dense<0.000000e+00> : vector<16x128xf32>
    %3 = tpu.matmul %1, %2, %cst {dimension_numbers = #tpu.dot_dimension_numbers<[1], [0], [0], [1], [0, 0, 1, 1], [], []>} : vector<16x64xbf16>, vector<64x128xbf16>, vector<16x128xf32> -> vector<16x128xf32>
    %c0_3 = arith.constant 0 : index
    %c0_4 = arith.constant 0 : index
    %4 = vector.load %arg3[%c0_3, %c0_4] : memref<1x128xf32, #tpu.memory_space<vmem>>, vector<1x128xf32>
    %5 = vector.broadcast %4 : vector<1x128xf32> to vector<16x128xf32>
    %6 = arith.addf %3, %5 : vector<16x128xf32>
    %cst_5 = arith.constant 0.000000e+00 : f32
    %7 = vector.broadcast %cst_5 : f32 to vector<16x128xf32>
    %8 = arith.maximumf %6, %7 : vector<16x128xf32>
    %9 = arith.truncf %8 : vector<16x128xf32> to vector<16x128xbf16>
    %c0_6 = arith.constant 0 : index
    %c0_7 = arith.constant 0 : index
    %10 = vector.load %arg4[%c0_6, %c0_7] : memref<128x64xbf16, #tpu.memory_space<vmem>>, vector<128x64xbf16>
    %cst_8 = arith.constant dense<0.000000e+00> : vector<16x64xf32>
    %11 = tpu.matmul %9, %10, %cst_8 {dimension_numbers = #tpu.dot_dimension_numbers<[1], [0], [0], [1], [0, 0, 1, 1], [], []>} : vector<16x128xbf16>, vector<128x64xbf16>, vector<16x64xf32> -> vector<16x64xf32>
    %c0_9 = arith.constant 0 : index
    %c0_10 = arith.constant 0 : index
    %12 = vector.load %arg5[%c0_9, %c0_10] : memref<1x64xf32, #tpu.memory_space<vmem>>, vector<1x64xf32>
    %13 = vector.broadcast %12 : vector<1x64xf32> to vector<16x64xf32>
    %14 = arith.addf %11, %13 : vector<16x64xf32>
    %cst_11 = arith.constant 0.000000e+00 : f32
    %15 = vector.broadcast %cst_11 : f32 to vector<16x64xf32>
    %16 = arith.maximumf %14, %15 : vector<16x64xf32>
    %17 = arith.truncf %16 : vector<16x64xf32> to vector<16x64xbf16>
    %c0_12 = arith.constant 0 : index
    %c0_13 = arith.constant 0 : index
    %18 = vector.load %arg6[%c0_12, %c0_13] : memref<64x32xbf16, #tpu.memory_space<vmem>>, vector<64x32xbf16>
    %cst_14 = arith.constant dense<0.000000e+00> : vector<16x32xf32>
    %19 = tpu.matmul %17, %18, %cst_14 {dimension_numbers = #tpu.dot_dimension_numbers<[1], [0], [0], [1], [0, 0, 1, 1], [], []>} : vector<16x64xbf16>, vector<64x32xbf16>, vector<16x32xf32> -> vector<16x32xf32>
    %c0_15 = arith.constant 0 : index
    %c0_16 = arith.constant 0 : index
    %20 = vector.load %arg7[%c0_15, %c0_16] : memref<1x32xf32, #tpu.memory_space<vmem>>, vector<1x32xf32>
    %21 = vector.broadcast %20 : vector<1x32xf32> to vector<16x32xf32>
    %22 = arith.addf %19, %21 : vector<16x32xf32>
    %cst_17 = arith.constant 0.000000e+00 : f32
    %23 = vector.broadcast %cst_17 : f32 to vector<16x32xf32>
    %24 = arith.maximumf %22, %23 : vector<16x32xf32>
    %25 = arith.truncf %24 : vector<16x32xf32> to vector<16x32xbf16>
    %c0_18 = arith.constant 0 : index
    %c0_19 = arith.constant 0 : index
    %26 = vector.load %arg8[%c0_18, %c0_19] : memref<32x128xbf16, #tpu.memory_space<vmem>>, vector<32x128xbf16>
    %cst_20 = arith.constant dense<0.000000e+00> : vector<16x128xf32>
    %27 = tpu.matmul %25, %26, %cst_20 {dimension_numbers = #tpu.dot_dimension_numbers<[1], [0], [0], [1], [0, 0, 1, 1], [], []>} : vector<16x32xbf16>, vector<32x128xbf16>, vector<16x128xf32> -> vector<16x128xf32>
    %c0_21 = arith.constant 0 : index
    %c0_22 = arith.constant 0 : index
    %28 = vector.load %arg9[%c0_21, %c0_22] : memref<1x128xf32, #tpu.memory_space<vmem>>, vector<1x128xf32>
    %29 = vector.broadcast %28 : vector<1x128xf32> to vector<16x128xf32>
    %30 = arith.addf %27, %29 : vector<16x128xf32>
    %cst_23 = arith.constant dense<0xFF800000> : vector<16xf32>
    %31 = vector.multi_reduction <maximumf>, %30, %cst_23 [1] : vector<16x128xf32> to vector<16xf32>
    %32 = vector.shape_cast %31 : vector<16xf32> to vector<16x1xf32>
    %33 = vector.broadcast %32 : vector<16x1xf32> to vector<16x128xf32>
    %34 = arith.subf %30, %33 : vector<16x128xf32>
    %35 = math.exp %34 : vector<16x128xf32>
    %cst_24 = arith.constant dense<0.000000e+00> : vector<16xf32>
    %36 = vector.multi_reduction <add>, %35, %cst_24 [1] : vector<16x128xf32> to vector<16xf32>
    %37 = vector.shape_cast %36 : vector<16xf32> to vector<16x1xf32>
    %38 = math.log %37 : vector<16x1xf32>
    %39 = vector.broadcast %38 : vector<16x1xf32> to vector<16x128xf32>
    %40 = arith.subf %34, %39 : vector<16x128xf32>
    %c0_25 = arith.constant 0 : index
    %c0_26 = arith.constant 0 : index
    %41 = vector.load %arg10[%c0_25, %c0_26] : memref<16x128xf32, #tpu.memory_space<vmem>>, vector<16x128xf32>
    tpu.vector_store %arg10[%c0_25, %c0_26], %40 {strides = array<i32>} : memref<16x128xf32, #tpu.memory_space<vmem>>, vector<16x128xf32>,
    return
  }
  func.func @transform_0(%arg0: i32) -> (i32, i32) {
    %c0_i32 = arith.constant 0 : i32
    %c0_i32_0 = arith.constant 0 : i32
    return %arg0, %c0_i32 : i32, i32
  }
  func.func @transform_1(%arg0: i32) -> (i32, i32) {
    %c0_i32 = arith.constant 0 : i32
    %c0_i32_0 = arith.constant 0 : i32
    %c0_i32_1 = arith.constant 0 : i32
    return %c0_i32, %c0_i32_0 : i32, i32
  }
  func.func @transform_2(%arg0: i32) -> (i32, i32) {
    %c0_i32 = arith.constant 0 : i32
    %c0_i32_0 = arith.constant 0 : i32
    %c0_i32_1 = arith.constant 0 : i32
    return %c0_i32, %c0_i32_0 : i32, i32
  }
  func.func @transform_3(%arg0: i32) -> (i32, i32) {
    %c0_i32 = arith.constant 0 : i32
    %c0_i32_0 = arith.constant 0 : i32
    %c0_i32_1 = arith.constant 0 : i32
    return %c0_i32, %c0_i32_0 : i32, i32
  }
  func.func @transform_4(%arg0: i32) -> (i32, i32) {
    %c0_i32 = arith.constant 0 : i32
    %c0_i32_0 = arith.constant 0 : i32
    %c0_i32_1 = arith.constant 0 : i32
    return %c0_i32, %c0_i32_0 : i32, i32
  }
  func.func @transform_5(%arg0: i32) -> (i32, i32) {
    %c0_i32 = arith.constant 0 : i32
    %c0_i32_0 = arith.constant 0 : i32
    %c0_i32_1 = arith.constant 0 : i32
    return %c0_i32, %c0_i32_0 : i32, i32
  }
  func.func @transform_6(%arg0: i32) -> (i32, i32) {
    %c0_i32 = arith.constant 0 : i32
    %c0_i32_0 = arith.constant 0 : i32
    %c0_i32_1 = arith.constant 0 : i32
    return %c0_i32, %c0_i32_0 : i32, i32
  }
  func.func @transform_7(%arg0: i32) -> (i32, i32) {
    %c0_i32 = arith.constant 0 : i32
    %c0_i32_0 = arith.constant 0 : i32
    %c0_i32_1 = arith.constant 0 : i32
    return %c0_i32, %c0_i32_0 : i32, i32
  }
  func.func @transform_8(%arg0: i32) -> (i32, i32) {
    %c0_i32 = arith.constant 0 : i32
    %c0_i32_0 = arith.constant 0 : i32
    %c0_i32_1 = arith.constant 0 : i32
    return %c0_i32, %c0_i32_0 : i32, i32
  }
  func.func @transform_9(%arg0: i32) -> (i32, i32) {
    %c0_i32 = arith.constant 0 : i32
    %c0_i32_0 = arith.constant 0 : i32
    return %arg0, %c0_i32 : i32, i32
  }
}

</mosaic_0001>

<llo_original>
// kernel: tpu_custom_call.1
$region0: #{tpu_custom_call.1}
  #allocation0 [shape = 'u32[]', space=smem, size = 0x4, offset = 0x4, fixed_abs, tag = 'smem constant byte address 0x4 - core index']
  #allocation1 [shape = 'u32[72,128]{1,0:T(1,128)}', space=vmem, size = 0x9000, scoped, tag = 'internal scratch']
  %s0 = inlined_call_operand.vmem [shape: f32[16,64], index: 0, kind: input, shape index: {}]
  %s1 = inlined_call_operand.vmem [shape: bf16[64,128], index: 1, kind: input, shape index: {}]
  %s2 = inlined_call_operand.vmem [shape: f32[1,128], index: 2, kind: input, shape index: {}]
  %s3 = inlined_call_operand.vmem [shape: bf16[128,64], index: 3, kind: input, shape index: {}]
  %s4 = inlined_call_operand.vmem [shape: f32[1,64], index: 4, kind: input, shape index: {}]
  %s5 = inlined_call_operand.vmem [shape: bf16[64,32], index: 5, kind: input, shape index: {}]
  %s6 = inlined_call_operand.vmem [shape: f32[1,32], index: 6, kind: input, shape index: {}]
  %s7 = inlined_call_operand.vmem [shape: bf16[32,128], index: 7, kind: input, shape index: {}]
  %s8 = inlined_call_operand.vmem [shape: f32[1,128], index: 8, kind: input, shape index: {}]
  %s9 = inlined_call_operand.hbm [shape: f32[16,128], index: 9, kind: output, shape index: {}]
  %s10 = sld [smem:[#allocation0]]
  $region46: #{tpu_custom_call.1} parent=0
    _
  %s12 = ssub.s32 1, %s10
  %s13 = scalar_select 0, %s12, %s10
  $region1: #{tpu_custom_call.1} parent=0
    #allocation2 [shape = 'u8[8192]{0}', space=vmem, size = 0x2000, scoped, tag = 'output window, operand 0, single buffered']
    #allocation3 [shape = 's32[1]{0}', space=sflag, size = 0x4, scoped, tag = 'scoped memory for tpu_custom_call.1']
    %14 = vsyncpa [#allocation3], 0
    // Predicated region
    $region2: #{tpu_custom_call.1} parent=1 // pred_check
      _
    $region3: #{tpu_custom_call.1} parent=1 // pred_check_branch
      %16 = sbr.rel (0) target = $region5
    $region4: #{tpu_custom_call.1} parent=1 // pred_region
      _
    $region5: #{tpu_custom_call.1} parent=1 // pred_fallthru
      _
    // Predicated region
    $region6: #{tpu_custom_call.1} parent=1 // pred_check
      _
    $region7: #{tpu_custom_call.1} parent=1 // pred_check_branch
      %18 = sbr.rel (0) target = $region9
    $region8: #{tpu_custom_call.1} parent=1 // pred_region
      _
    $region9: #{tpu_custom_call.1} parent=1 // pred_fallthru
      _
    // Predicated region
    $region10: #{tpu_custom_call.1} parent=1 // pred_check
      _
    $region11: #{tpu_custom_call.1} parent=1 // pred_check_branch
      %20 = sbr.rel (0) target = $region13
    $region12: #{tpu_custom_call.1} parent=1 // pred_region
      _
    $region13: #{tpu_custom_call.1} parent=1 // pred_fallthru
      _
    // Predicated region
    $region14: #{tpu_custom_call.1} parent=1 // pred_check
      _
    $region15: #{tpu_custom_call.1} parent=1 // pred_check_branch
      %22 = sbr.rel (0) target = $region17
    $region16: #{tpu_custom_call.1} parent=1 // pred_region
      _
    $region17: #{tpu_custom_call.1} parent=1 // pred_fallthru
      _
    // Predicated region
    $region18: #{tpu_custom_call.1} parent=1 // pred_check
      _
    $region19: #{tpu_custom_call.1} parent=1 // pred_check_branch
      %24 = sbr.rel (0) target = $region21
    $region20: #{tpu_custom_call.1} parent=1 // pred_region
      _
    $region21: #{tpu_custom_call.1} parent=1 // pred_fallthru
      _
    // Predicated region
    $region22: #{tpu_custom_call.1} parent=1 // pred_check
      _
    $region23: #{tpu_custom_call.1} parent=1 // pred_check_branch
      %26 = sbr.rel (0) target = $region25
    $region24: #{tpu_custom_call.1} parent=1 // pred_region
      _
    $region25: #{tpu_custom_call.1} parent=1 // pred_fallthru
      _
    // Predicated region
    $region26: #{tpu_custom_call.1} parent=1 // pred_check
      _
    $region27: #{tpu_custom_call.1} parent=1 // pred_check_branch
      %28 = sbr.rel (0) target = $region29
    $region28: #{tpu_custom_call.1} parent=1 // pred_region
      _
    $region29: #{tpu_custom_call.1} parent=1 // pred_fallthru
      _
    // Predicated region
    $region30: #{tpu_custom_call.1} parent=1 // pred_check
      _
    $region31: #{tpu_custom_call.1} parent=1 // pred_check_branch
      %30 = sbr.rel (0) target = $region33
    $region32: #{tpu_custom_call.1} parent=1 // pred_region
      _
    $region33: #{tpu_custom_call.1} parent=1 // pred_fallthru
      _
    // Predicated region
    $region34: #{tpu_custom_call.1} parent=1 // pred_check
      _
    $region35: #{tpu_custom_call.1} parent=1 // pred_check_branch
      %32 = sbr.rel (0) target = $region37
    $region36: #{tpu_custom_call.1} parent=1 // pred_region
      _
    $region37: #{tpu_custom_call.1} parent=1 // pred_fallthru
      _
    %v34 = vld [vmem:[%s0] sm:$0xff]
    %v35 = vld [vmem:[%s0 + $0x8] sm:$0xff]
    %v36 = vpack.c.bf16 %v35, %v34
    %v37 = vld [vmem:[%s1] sm:$0xf]
    %v38 = vld [vmem:[%s1 + $0x4] sm:$0xf]
    %v39 = vld [vmem:[%s1 + $0x8] sm:$0xf]
    %v40 = vld [vmem:[%s1 + $0xc] sm:$0xf]
    %v41 = vld [vmem:[%s1 + $0x10] sm:$0xf]
    %v42 = vld [vmem:[%s1 + $0x14] sm:$0xf]
    %v43 = vld [vmem:[%s1 + $0x18] sm:$0xf]
    %v44 = vld [vmem:[%s1 + $0x1c] sm:$0xf]
    %v45 = vld [vmem:[%s2] sm:$0x1]
    %v47 = vperm.slane %v45, 0
    %v57 = vunpack.c.l.b16 %v37
    %v58 = vunpack.c.l.b16 %v38
    %v59 = vunpack.c.l.b16 %v39
    %v60 = vunpack.c.l.b16 %v40
    %v61 = vunpack.c.l.b16 %v41
    %v62 = vunpack.c.l.b16 %v42
    %v63 = vunpack.c.l.b16 %v43
    %v64 = vunpack.c.l.b16 %v44
    %v65 = vpack.c.b16 %v58, %v57
    %v66 = vpack.c.b16 %v60, %v59
    %v67 = vpack.c.b16 %v62, %v61
    %v68 = vpack.c.b16 %v64, %v63
    %vm73 = vcmask 523264
    %v75 = vsel %vm73, %v36, 0
    %77 = vmatpush.bf16.msra.mxu0 0
    %78 = vmatpush.bf16.msra.mxu0 0
    %79 = vmatpush.bf16.msra.mxu0 0
    %80 = vmatpush.bf16.msra.mxu0 0
    %81 = vmatpush.bf16.msra.mxu0 %v68
    %82 = vmatpush.bf16.msra.mxu0 %v67
    %83 = vmatpush.bf16.msra.mxu0 %v66
    %84 = vmatpush.bf16.msra.mxu0 %v65
    %85 = vmatmul.bf16.gmra.mxu0 %v75
    %v86 = vpop.f32.mrf.mxu0
    %v87 = vadd.f32 %v47, %v86
    %v88 = vpop.f32.mrf.mxu0
    %v89 = vadd.f32 %v47, %v88
    %90 = vdwg.mxu0
    %v91 = vmax.f32 %v87, 0.0
    %v92 = vmax.f32 %v89, 0.0
    %v93 = vpack.c.bf16 %v92, %v91
    %v94 = vld [vmem:[%s3] sm:$0xf]
    %v95 = vld [vmem:[%s3 + $0x4] sm:$0xf]
    %v96 = vld [vmem:[%s3 + $0x8] sm:$0xf]
    %v97 = vld [vmem:[%s3 + $0xc] sm:$0xf]
    %v98 = vld [vmem:[%s3 + $0x10] sm:$0xf]
    %v99 = vld [vmem:[%s3 + $0x14] sm:$0xf]
    %v100 = vld [vmem:[%s3 + $0x18] sm:$0xf]
    %v101 = vld [vmem:[%s3 + $0x1c] sm:$0xf]
    %v102 = vld [vmem:[%s3 + $0x20] sm:$0xf]
    %v103 = vld [vmem:[%s3 + $0x24] sm:$0xf]
    %v104 = vld [vmem:[%s3 + $0x28] sm:$0xf]
    %v105 = vld [vmem:[%s3 + $0x2c] sm:$0xf]
    %v106 = vld [vmem:[%s3 + $0x30] sm:$0xf]
    %v107 = vld [vmem:[%s3 + $0x34] sm:$0xf]
    %v108 = vld [vmem:[%s3 + $0x38] sm:$0xf]
    %v109 = vld [vmem:[%s3 + $0x3c] sm:$0xf]
    %v110 = vld [vmem:[%s4] sm:$0x1]
    %v112 = vperm.slane %v110, 0
    %v130 = vunpack.c.l.b16 %v94
    %v131 = vunpack.c.l.b16 %v95
    %v132 = vunpack.c.l.b16 %v96
    %v133 = vunpack.c.l.b16 %v97
    %v134 = vunpack.c.l.b16 %v98
    %v135 = vunpack.c.l.b16 %v99
    %v136 = vunpack.c.l.b16 %v100
    %v137 = vunpack.c.l.b16 %v101
    %v138 = vunpack.c.l.b16 %v102
    %v139 = vunpack.c.l.b16 %v103
    %v140 = vunpack.c.l.b16 %v104
    %v141 = vunpack.c.l.b16 %v105
    %v142 = vunpack.c.l.b16 %v106
    %v143 = vunpack.c.l.b16 %v107
    %v144 = vunpack.c.l.b16 %v108
    %v145 = vunpack.c.l.b16 %v109
    %v146 = vpack.c.b16 %v131, %v130
    %v147 = vpack.c.b16 %v133, %v132
    %v148 = vpack.c.b16 %v135, %v134
    %v149 = vpack.c.b16 %v137, %v136
    %v150 = vpack.c.b16 %v139, %v138
    %v151 = vpack.c.b16 %v141, %v140
    %v152 = vpack.c.b16 %v143, %v142
    %v153 = vpack.c.b16 %v145, %v144
    %162 = vmatpush.bf16.msra.mxu0 %v153
    %163 = vmatpush.bf16.msra.mxu0 %v152
    %164 = vmatpush.bf16.msra.mxu0 %v151
    %165 = vmatpush.bf16.msra.mxu0 %v150
    %166 = vmatpush.bf16.msra.mxu0 %v149
    %167 = vmatpush.bf16.msra.mxu0 %v148
    %168 = vmatpush.bf16.msra.mxu0 %v147
    %169 = vmatpush.bf16.msra.mxu0 %v146
    %170 = vmatmul.bf16.gmra.mxu0 %v93
    %v171 = vpop.f32.mrf.mxu0
    %v172 = vadd.f32 %v112, %v171
    %v173 = vpop.f32.mrf.mxu0
    %v174 = vadd.f32 %v112, %v173
    %175 = vdwg.mxu0
    %v176 = vmax.f32 %v172, 0.0
    %v177 = vmax.f32 %v174, 0.0
    %v178 = vpack.c.bf16 %v177, %v176
    %v179 = vld [vmem:[%s5] sm:$0xf]
    %v180 = vld [vmem:[%s5 + $0x4] sm:$0xf]
    %v181 = vld [vmem:[%s5 + $0x8] sm:$0xf]
    %v182 = vld [vmem:[%s5 + $0xc] sm:$0xf]
    %v183 = vld [vmem:[%s5 + $0x10] sm:$0xf]
    %v184 = vld [vmem:[%s5 + $0x14] sm:$0xf]
    %v185 = vld [vmem:[%s5 + $0x18] sm:$0xf]
    %v186 = vld [vmem:[%s5 + $0x1c] sm:$0xf]
    %v187 = vld [vmem:[%s6] sm:$0x1]
    %v189 = vperm.slane %v187, 0
    %v199 = vunpack.c.l.b16 %v179
    %v200 = vunpack.c.l.b16 %v180
    %v201 = vunpack.c.l.b16 %v181
    %v202 = vunpack.c.l.b16 %v182
    %v203 = vunpack.c.l.b16 %v183
    %v204 = vunpack.c.l.b16 %v184
    %v205 = vunpack.c.l.b16 %v185
    %v206 = vunpack.c.l.b16 %v186
    %v207 = vpack.c.b16 %v200, %v199
    %v208 = vpack.c.b16 %v202, %v201
    %v209 = vpack.c.b16 %v204, %v203
    %v210 = vpack.c.b16 %v206, %v205
    %v216 = vsel %vm73, %v178, 0
    %218 = vmatpush.bf16.msra.mxu0 0
    %219 = vmatpush.bf16.msra.mxu0 0
    %220 = vmatpush.bf16.msra.mxu0 0
    %221 = vmatpush.bf16.msra.mxu0 0
    %222 = vmatpush.bf16.msra.mxu0 %v210
    %223 = vmatpush.bf16.msra.mxu0 %v209
    %224 = vmatpush.bf16.msra.mxu0 %v208
    %225 = vmatpush.bf16.msra.mxu0 %v207
    %226 = vmatmul.bf16.gmra.mxu0 %v216
    %v227 = vpop.f32.mrf.mxu0
    %v228 = vadd.f32 %v189, %v227
    %v229 = vpop.f32.mrf.mxu0
    %v230 = vadd.f32 %v189, %v229
    %231 = vdwg.mxu0
    %v232 = vmax.f32 %v228, 0.0
    %v233 = vmax.f32 %v230, 0.0
    %v234 = vpack.c.bf16 %v233, %v232
    %v235 = vld [vmem:[%s7] sm:$0xf]
    %v236 = vld [vmem:[%s7 + $0x4] sm:$0xf]
    %v237 = vld [vmem:[%s7 + $0x8] sm:$0xf]
    %v238 = vld [vmem:[%s7 + $0xc] sm:$0xf]
    %v239 = vld [vmem:[%s8] sm:$0x1]
    %v241 = vperm.slane %v239, 0
    %v247 = vunpack.c.l.b16 %v235
    %v248 = vunpack.c.l.b16 %v236
    %v249 = vunpack.c.l.b16 %v237
    %v250 = vunpack.c.l.b16 %v238
    %v251 = vpack.c.b16 %v248, %v247
    %v252 = vpack.c.b16 %v250, %v249
    %vm255 = vcmask 261120
    %v257 = vsel %vm255, %v234, 0
    %259 = vmatpush.bf16.msra.mxu0 0
    %260 = vmatpush.bf16.msra.mxu0 0
    %261 = vmatpush.bf16.msra.mxu0 0
    %262 = vmatpush.bf16.msra.mxu0 0
    %263 = vmatpush.bf16.msra.mxu0 0
    %264 = vmatpush.bf16.msra.mxu0 0
    %265 = vmatpush.bf16.msra.mxu0 %v252
    %266 = vmatpush.bf16.msra.mxu0 %v251
    %267 = vmatmul.bf16.gmra.mxu0 %v257
    %v268 = vpop.f32.mrf.mxu0
    %v269 = vadd.f32 %v241, %v268
    %v270 = vpop.f32.mrf.mxu0
    %v271 = vadd.f32 %v241, %v270
    %272 = vdwg.mxu0
    %273 = vmax.xlane.f32.xlu0 %v269
    %v274 = vpop.xlane.xlu0 %273
    %275 = vmax.xlane.f32.xlu0 %v271
    %v276 = vpop.xlane.xlu0 %275
    %v277 = vsub.f32 %v269, %v274
    %v278 = vsub.f32 %v271, %v276
    %v279 = vmul.f32 %v277, 1.442695
    %v280 = vpow.pop %v279
    %v281 = vmul.f32 %v278, 1.442695
    %v282 = vpow.pop %v281
    %283 = vadd.xlane.f32.xlu0 %v280
    %v284 = vpop.xlane.xlu0 %283
    %285 = vadd.xlane.f32.xlu0 %v282
    %v286 = vpop.xlane.xlu0 %285
    %v287 = vlog2.pop %v284
    %v288 = vmul.f32 %v287, 0.6931472
    %v289 = vlog2.pop %v286
    %v290 = vmul.f32 %v289, 0.6931472
    %v291 = vsub.f32 %v277, %v288
    %v292 = vsub.f32 %v278, %v290
    %293 = vst [vmem:[#allocation2] sm:$0xff] %v291
    %294 = vst [vmem:[#allocation2 + $0x8] sm:$0xff] %v292
    // Predicated region
    $region38: #{tpu_custom_call.1} parent=1 // pred_check
      _
    $region39: #{tpu_custom_call.1} parent=1 // pred_check_branch
      %296 = sbr.rel (0) target = $region41
    $region40: #{tpu_custom_call.1} parent=1 // pred_region
      %298 = vsyncadd [#allocation3], 0
      %s299 = sshll.u32 [#allocation2], 4
      %s300 = int_to_ptr.vmem [resolvable:$true] %s299
      %s301 = sshll.u32 %s9, 4
      %s302 = int_to_ptr.hbm [resolvable:$true] %s301
      %307 = dma.vmem_to_hbm [thread:$0]  %s300, 256, %s302, [#allocation3], 128, 128, 8
    $region41: #{tpu_custom_call.1} parent=1 // pred_fallthru
      _
    // Predicated region
    $region42: #{tpu_custom_call.1} parent=1 // pred_check
      _
    $region43: #{tpu_custom_call.1} parent=1 // pred_check_branch
      %309 = sbr.rel (0) target = $region45
    $region44: #{tpu_custom_call.1} parent=1 // pred_region
      %311 = dma.done [#allocation3], 256
    $region45: #{tpu_custom_call.1} parent=1 // pred_fallthru
      _
    %312 = vsyncpa [#allocation3], 1

</llo_original>
